<compile_context>
chip_gen: v7x
topology: tpu7x:2x2x1
jax: 0.10.0
libtpu: 0.0.40
codegen_flags: <defaults>
</compile_context>

<pallas_src>
import jax
import jax.numpy as jnp
from jax import lax
from jax.experimental import pallas as pl
from jax.experimental.pallas import tpu as pltpu

_LANES = 128
_SUBLANES = 8
_N_ACC = 4                   # independent accumulator vregs per block
_UNROLLED_CHUNK_LIMIT = 32   # fully unroll the chunk loop up to this many chunks
# 4096 rows x 128 lanes x f32 = 2 MiB per input per grid step.
_DEFAULT_MAX_BLOCK_ROWS = 4096


def _make_partial_kernel(block_rows):
    """Kernel: fold a (block_rows, 128) slab pair into an (8, 128) partial sum."""
    nchunks = block_rows // _SUBLANES
    n_acc = min(_N_ACC, nchunks)

    def kernel(u_ref, h_ref, out_ref):
        def sq(start):
            d = u_ref[pl.ds(start, _SUBLANES), :] - h_ref[pl.ds(start, _SUBLANES), :]
            return d * d

        zero = jnp.zeros((_SUBLANES, _LANES), jnp.float32)

        if nchunks <= _UNROLLED_CHUNK_LIMIT:
            # Small block: fully unrolled static slices, round-robin accumulators.
            accs = [zero] * n_acc
            for c in range(nchunks):
                accs[c % n_acc] = accs[c % n_acc] + sq(c * _SUBLANES)
        else:
            # Large block: bounded fori_loop; n_acc independent VALU chains per
            # iteration keep the accumulate from serializing behind one vreg.
            ngroups = nchunks // n_acc
            rem = nchunks - ngroups * n_acc

            def body(g, accs):
                base = g * (n_acc * _SUBLANES)
                return tuple(
                    acc + sq(pl.multiple_of(base + a * _SUBLANES, _SUBLANES))
                    for a, acc in enumerate(accs)
                )

            accs = list(lax.fori_loop(0, ngroups, body, (zero,) * n_acc, unroll=2))
            for r in range(rem):
                accs[r % n_acc] = accs[r % n_acc] + sq((ngroups * n_acc + r) * _SUBLANES)

        total = accs[0]
        for acc in accs[1:]:
            total = total + acc
        out_ref[...] = total

    return kernel


def _choose_blocks(rows, max_block_rows):
    """Pick (block_rows, num_blocks) covering a prefix of `rows` (rows % 8 == 0).

    Prefers >= 2 equal blocks (so a "parallel" grid can shard across v7x's two
    TensorCores) and blocks as large as max_block_rows allows.  If no exact
    equal-block cover with reasonably large blocks exists, covers the largest
    prefix with max-size blocks; the caller sums the ragged remainder in JAX.
    """
    q = rows // _SUBLANES
    max_b = max(1, max_block_rows // _SUBLANES)
    cap = min(q, max_b) if q < 2 else max(1, min(q // 2, max_b))
    for b in range(cap, 0, -1):
        if q % b == 0:
            if b * _SUBLANES >= min(256, cap * _SUBLANES):
                return b * _SUBLANES, q // b
            break
    block_rows = cap * _SUBLANES
    return block_rows, rows // block_rows


def cnnh_loss(u, ind, H, *, max_block_rows=_DEFAULT_MAX_BLOCK_ROWS):
    """mean((u - H[ind])**2) with the squared-diff reduction done by a Pallas kernel."""
    assert max_block_rows >= _SUBLANES and max_block_rows % _SUBLANES == 0
    batch, bit = u.shape
    total = batch * bit
    inv_total = 1.0 / float(total)

    # Dense row gather + single cast in the wrapper (XLA).
    h = jnp.take(H, ind, axis=0).astype(jnp.float32)
    u_flat = u.astype(jnp.float32).reshape(-1)
    h_flat = h.reshape(-1)

    # Too small for a single (8, 128) tile: a kernel launch is pure overhead.
    if total < _SUBLANES * _LANES:
        d = u_flat - h_flat
        return jnp.sum(d * d) * inv_total

    # Lane-dense (rows, 128) view.  When total % 128 == 0 this is a free reshape;
    # otherwise pad the flat arrays with zeros (zeros on BOTH operands contribute
    # exactly 0 to the squared-diff sum).
    if total % _LANES == 0:
        rows_all = total // _LANES
        u_slab = u_flat.reshape(rows_all, _LANES)
        h_slab = h_flat.reshape(rows_all, _LANES)
    else:
        rows_all = -(-total // _LANES)
        pad = rows_all * _LANES - total
        u_slab = jnp.pad(u_flat, (0, pad)).reshape(rows_all, _LANES)
        h_slab = jnp.pad(h_flat, (0, pad)).reshape(rows_all, _LANES)

    rows_main = (rows_all // _SUBLANES) * _SUBLANES        # >= 8 since total >= 1024
    block_rows, num_blocks = _choose_blocks(rows_main, max_block_rows)
    covered_rows = block_rows * num_blocks

    # Ragged remainder not covered by the grid: tiny fused XLA reduction (avoids
    # re-writing/re-reading both operands through HBM just to pad them).
    if covered_rows < rows_all:
        dt = u_slab[covered_rows:] - h_slab[covered_rows:]
        tail = jnp.sum(dt * dt)
    else:
        tail = jnp.zeros((), jnp.float32)

    covered = covered_rows * _LANES
    cost = pl.CostEstimate(
        flops=3 * covered,
        transcendentals=0,
        bytes_accessed=2 * 4 * covered + num_blocks * _SUBLANES * _LANES * 4,
    )

    cp_kwargs = dict(dimension_semantics=("parallel",))
    vmem_needed = 2 * 2 * block_rows * _LANES * 4 + 2 * _SUBLANES * _LANES * 4
    if vmem_needed > (12 << 20):
        # Larger-than-default blocks (e.g. user-raised max_block_rows on v7x):
        # raise the scoped VMEM limit explicitly instead of assuming it.
        cp_kwargs["vmem_limit_bytes"] = min(vmem_needed + (8 << 20), 64 << 20)

    partials = pl.pallas_call(
        _make_partial_kernel(block_rows),
        grid=(num_blocks,),
        in_specs=[
            pl.BlockSpec((block_rows, _LANES), lambda i: (i, 0)),
            pl.BlockSpec((block_rows, _LANES), lambda i: (i, 0)),
        ],
        out_specs=pl.BlockSpec((_SUBLANES, _LANES), lambda i: (i, 0)),
        out_shape=jax.ShapeDtypeStruct((num_blocks * _SUBLANES, _LANES), jnp.float32),
        compiler_params=pltpu.CompilerParams(**cp_kwargs),
        cost_estimate=cost,
    )(u_slab, h_slab)

    # Tiny final combine (num_blocks x 8 x 128) + the single 1/(batch*bit) scale.
    return (jnp.sum(partials) + tail) * inv_total


def make_target_codes(key, num_train, bit):
    """Deterministic stand-in for stage_one's output: +/-1 codes."""
    r = jax.random.uniform(key, (num_train, bit), dtype=jnp.float32) * 2.0 - 1.0
    h = jnp.sign(r)
    return jnp.where(h == 0, 1.0, h).astype(jnp.float32)


if __name__ == "__main__":
    def run_case(name, *, num_train, bit, batch, seed,
                 max_block_rows=_DEFAULT_MAX_BLOCK_ROWS):
        base = jax.random.fold_in(jax.random.PRNGKey(0), seed)
        k_h, k_u, k_i = jax.random.split(base, 3)
        H = make_target_codes(k_h, num_train, bit)
        u = jax.random.normal(k_u, (batch, bit), dtype=jnp.float32)
        ind = jax.random.randint(k_i, (batch,), 0, num_train, dtype=jnp.int32)
        loss = jax.block_until_ready(cnnh_loss(u, ind, H, max_block_rows=max_block_rows))
        ref = jnp.mean((u - H[ind]) ** 2)
        assert jnp.allclose(loss, ref, rtol=1e-5, atol=1e-5), (name, loss, ref)

    # Copy-free path, single block (total = 1024 -> 8 rows x 128 lanes).
    run_case("single_block", num_train=64, bit=32, batch=32, seed=0)
    # Copy-free path, 2 parallel blocks (total = 4096 -> 2 x 16 rows).
    run_case("two_blocks", num_train=128, bit=64, batch=64, seed=1)
    # Copy-free path with a ragged sub-(8,128) tail summed in plain JAX.
    run_case("ragged_tail", num_train=64, bit=32, batch=36, seed=2)
    # total % 128 != 0 -> padded-flat fallback + JAX tail.
    run_case("misaligned", num_train=50, bit=120, batch=10, seed=3)
    # Larger case (2 blocks x 512 rows) exercising the in-kernel fori_loop /
    # multi-accumulator path.
    run_case("fori_path", num_train=96, bit=2048, batch=64, seed=4)
    # Capped block size -> grid of 4 blocks.
    run_case("many_blocks", num_train=64, bit=64, batch=64, seed=5, max_block_rows=8)

    print("KERNEL_OK")
</pallas_src>

<mosaic_0001>
module attributes {stable_mosaic.version = 11 : i64} {
  func.func @kernel(%arg0: i32, %arg1: memref<8x128xf32, #tpu.memory_space<vmem>>, %arg2: memref<8x128xf32, #tpu.memory_space<vmem>>, %arg3: memref<8x128xf32, #tpu.memory_space<vmem>>) attributes {dimension_semantics = [#tpu.dimension_semantics<parallel>], iteration_bounds = array<i64: 1>, scalar_prefetch = 0 : i64, scratch_operands = 0 : i64, tpu.core_type = #tpu.core_type<tc>, window_params = [{transform_indices = @transform_0, window_bounds = array<i64: 8, 128>}, {transform_indices = @transform_1, window_bounds = array<i64: 8, 128>}, {transform_indices = @transform_2, window_bounds = array<i64: 8, 128>}]} {
    %cst = arith.constant 0.000000e+00 : f32
    %0 = vector.broadcast %cst : f32 to vector<8x128xf32>
    %c0 = arith.constant 0 : index
    %c0_0 = arith.constant 0 : index
    %1 = vector.load %arg1[%c0, %c0_0] : memref<8x128xf32, #tpu.memory_space<vmem>>, vector<8x128xf32>
    %c0_1 = arith.constant 0 : index
    %c0_2 = arith.constant 0 : index
    %2 = vector.load %arg2[%c0_1, %c0_2] : memref<8x128xf32, #tpu.memory_space<vmem>>, vector<8x128xf32>
    %3 = arith.subf %1, %2 : vector<8x128xf32>
    %4 = arith.mulf %3, %3 : vector<8x128xf32>
    %5 = arith.addf %0, %4 : vector<8x128xf32>
    %c0_3 = arith.constant 0 : index
    %c0_4 = arith.constant 0 : index
    %6 = vector.load %arg3[%c0_3, %c0_4] : memref<8x128xf32, #tpu.memory_space<vmem>>, vector<8x128xf32>
    tpu.vector_store %arg3[%c0_3, %c0_4], %5 {strides = array<i32>} : memref<8x128xf32, #tpu.memory_space<vmem>>, vector<8x128xf32>,
    return
  }
  func.func @transform_0(%arg0: i32) -> (i32, i32) {
    %c0_i32 = arith.constant 0 : i32
    %c0_i32_0 = arith.constant 0 : i32
    return %arg0, %c0_i32 : i32, i32
  }
  func.func @transform_1(%arg0: i32) -> (i32, i32) {
    %c0_i32 = arith.constant 0 : i32
    %c0_i32_0 = arith.constant 0 : i32
    return %arg0, %c0_i32 : i32, i32
  }
  func.func @transform_2(%arg0: i32) -> (i32, i32) {
    %c0_i32 = arith.constant 0 : i32
    %c0_i32_0 = arith.constant 0 : i32
    return %arg0, %c0_i32 : i32, i32
  }
}

</mosaic_0001>

<llo_original>
// kernel: tpu_custom_call.1
$region0: #{tpu_custom_call.1}
  #allocation0 [shape = 'u32[]', space=smem, size = 0x4, offset = 0x4, fixed_abs, tag = 'smem constant byte address 0x4 - core index']
  #allocation1 [shape = 'u32[144,128]{1,0:T(1,128)}', space=vmem, size = 0x12000, scoped, tag = 'internal scratch']
  %s0 = inlined_call_operand.hbm [shape: f32[8,128], index: 0, kind: input, shape index: {}]
  %s1 = inlined_call_operand.hbm [shape: f32[8,128], index: 1, kind: input, shape index: {}]
  %s2 = inlined_call_operand.hbm [shape: f32[8,128], index: 2, kind: output, shape index: {}]
  %s3 = sld [smem:[#allocation0]]
  $region26: #{tpu_custom_call.1} parent=0
    _
  %s5 = ssub.s32 1, %s3
  %s6 = scalar_select 0, %s5, %s3
  $region1: #{tpu_custom_call.1} parent=0
    #allocation2 [shape = 'u8[4096]{0}', space=vmem, size = 0x1000, scoped, tag = 'input window, operand 0, single buffered']
    #allocation3 [shape = 's32[1]{0}', space=sflag, size = 0x4, scoped, tag = 'scoped memory for tpu_custom_call.1']
    #allocation4 [shape = 's32[1]{0}', space=sflag, size = 0x4, scoped, tag = 'scoped memory for tpu_custom_call.1']
    #allocation5 [shape = 'u8[4096]{0}', space=vmem, size = 0x1000, scoped, tag = 'input window, operand 1, single buffered']
    #allocation6 [shape = 's32[1]{0}', space=sflag, size = 0x4, scoped, tag = 'scoped memory for tpu_custom_call.1']
    #allocation7 [shape = 'u8[4096]{0}', space=vmem, size = 0x1000, scoped, tag = 'output window, operand 0, single buffered']
    %7 = vsyncpa [#allocation3], 0
    %8 = vsyncpa [#allocation6], 0
    %9 = vsyncpa [#allocation4], 0
    // Predicated region
    $region2: #{tpu_custom_call.1} parent=1 // pred_check
      _
    $region3: #{tpu_custom_call.1} parent=1 // pred_check_branch
      %11 = sbr.rel (0) target = $region5
    $region4: #{tpu_custom_call.1} parent=1 // pred_region
      %s13 = ssub.s32 128, 128
      %14 = vsyncadd [#allocation3], %s13
      %s16 = sshll.u32 [#allocation2], 4
      %s17 = int_to_ptr.vmem [resolvable:$true] %s16
      %19 = dma.hbm_to_vmem [thread:$0]  %s0, 128, %s17, [#allocation3]
    $region5: #{tpu_custom_call.1} parent=1 // pred_fallthru
      _
    // Predicated region
    $region6: #{tpu_custom_call.1} parent=1 // pred_check
      _
    $region7: #{tpu_custom_call.1} parent=1 // pred_check_branch
      %21 = sbr.rel (0) target = $region9
    $region8: #{tpu_custom_call.1} parent=1 // pred_region
      %s23 = ssub.s32 128, 128
      %24 = vsyncadd [#allocation6], %s23
      %s26 = sshll.u32 [#allocation5], 4
      %s27 = int_to_ptr.vmem [resolvable:$true] %s26
      %29 = dma.hbm_to_vmem [thread:$0]  %s1, 128, %s27, [#allocation6]
    $region9: #{tpu_custom_call.1} parent=1 // pred_fallthru
      _
    // Predicated region
    $region10: #{tpu_custom_call.1} parent=1 // pred_check
      _
    $region11: #{tpu_custom_call.1} parent=1 // pred_check_branch
      %31 = sbr.rel (0) target = $region13
    $region12: #{tpu_custom_call.1} parent=1 // pred_region
      %32 = dma.done [#allocation3], 128
    $region13: #{tpu_custom_call.1} parent=1 // pred_fallthru
      _
    // Predicated region
    $region14: #{tpu_custom_call.1} parent=1 // pred_check
      _
    $region15: #{tpu_custom_call.1} parent=1 // pred_check_branch
      %34 = sbr.rel (0) target = $region17
    $region16: #{tpu_custom_call.1} parent=1 // pred_region
      %35 = dma.done [#allocation6], 128
    $region17: #{tpu_custom_call.1} parent=1 // pred_fallthru
      _
    %v36 = vld [vmem:[#allocation2] sm:$0xff]
    %v37 = vld [vmem:[#allocation5] sm:$0xff]
    %v38 = vsub.f32 %v36, %v37
    %v39 = vmul.f32 %v38, %v38
    %v40 = vadd.f32 %v39, 0.0
    %41 = vst [vmem:[#allocation7] sm:$0xff] %v40
    // Predicated region
    $region18: #{tpu_custom_call.1} parent=1 // pred_check
      _
    $region19: #{tpu_custom_call.1} parent=1 // pred_check_branch
      %43 = sbr.rel (0) target = $region21
    $region20: #{tpu_custom_call.1} parent=1 // pred_region
      %s45 = ssub.s32 128, 128
      %46 = vsyncadd [#allocation4], %s45
      %s48 = sshll.u32 [#allocation7], 4
      %s49 = int_to_ptr.vmem [resolvable:$true] %s48
      %51 = dma.vmem_to_hbm [thread:$0]  %s49, 128, %s2, [#allocation4]
    $region21: #{tpu_custom_call.1} parent=1 // pred_fallthru
      _
    // Predicated region
    $region22: #{tpu_custom_call.1} parent=1 // pred_check
      _
    $region23: #{tpu_custom_call.1} parent=1 // pred_check_branch
      %53 = sbr.rel (0) target = $region25
    $region24: #{tpu_custom_call.1} parent=1 // pred_region
      %54 = dma.done [#allocation4], 128
    $region25: #{tpu_custom_call.1} parent=1 // pred_fallthru
      _
    %55 = vsyncpa [#allocation3], 1
    %56 = vsyncpa [#allocation6], 1
    %57 = vsyncpa [#allocation4], 1

</llo_original>
